<compile_context>
chip_gen: v6e
topology: v6e:2x2x1
jax: 0.10.0
libtpu: 0.0.40
codegen_flags: <defaults>
</compile_context>

<pallas_src>
import jax
import jax.numpy as jnp
from jax.experimental import pallas as pl
from jax.experimental.pallas import tpu as pltpu

EPS = 1e-5
_VMEM_LIMIT_BYTES = 32 * 1024 * 1024   # safe on v5e/v6e/v7x, >> what we need
_TARGET_BLOCK_BYTES = 2 * 1024 * 1024  # ~2 MiB input blocks (1-4 MiB sweet spot)


# ---------------------------------------------------------------------------
# Kernels
# ---------------------------------------------------------------------------
def _revin_norm_kernel(x_ref, w_ref, b_ref, y_ref, stats_ref):
    # x_ref: (Bb, T, C) block; stats over axis=1 (time) only.
    x = x_ref[...].astype(jnp.float32)                               # (Bb, T, C)
    mean = jnp.mean(x, axis=1, keepdims=True)                        # (Bb, 1, C)
    xc = x - mean                                                    # reuse centered tensor
    var = jnp.mean(xc * xc, axis=1, keepdims=True)                   # unbiased=False
    std = jnp.sqrt(var + EPS)                                        # (Bb, 1, C)

    # Divide only on the small stats vector; full tile gets one fused mul-add.
    inv_std = pl.reciprocal(std, approx=False)                       # (Bb, 1, C)
    w = w_ref[...].astype(jnp.float32)[None, :, :]                   # (1, 1, C)
    b = b_ref[...].astype(jnp.float32)[None, :, :]                   # (1, 1, C)
    scale = inv_std * w                                              # (Bb, 1, C)

    y_ref[...] = (xc * scale + b).astype(y_ref.dtype)

    # Packed stats output: [:, 0] = mean, [:, 1] = stdev.
    stats_ref[:, 0:1, :] = mean.astype(stats_ref.dtype)
    stats_ref[:, 1:2, :] = std.astype(stats_ref.dtype)


def _revin_denorm_kernel(x_ref, stats_ref, w_ref, b_ref, y_ref):
    x = x_ref[...].astype(jnp.float32)                               # (Bb, T, C)
    mean = stats_ref[:, 0:1, :].astype(jnp.float32)                  # (Bb, 1, C)
    std = stats_ref[:, 1:2, :].astype(jnp.float32)                   # (Bb, 1, C)
    w = w_ref[...].astype(jnp.float32)[None, :, :]                   # (1, 1, C)
    b = b_ref[...].astype(jnp.float32)[None, :, :]                   # (1, 1, C)

    # x -> (x - b) / (w + eps^2) * std + mean, with the divide hoisted to the
    # small per-channel vector and a single fused scale over the tile.
    inv_w = pl.reciprocal(w + EPS * EPS, approx=False)               # (1, 1, C)
    scale = inv_w * std                                              # (Bb, 1, C)
    y_ref[...] = ((x - b) * scale + mean).astype(y_ref.dtype)


# ---------------------------------------------------------------------------
# Block-size selection
# ---------------------------------------------------------------------------
def _pick_block_b(B, T, C, itemsize, target_bytes=_TARGET_BLOCK_BYTES):
    """Largest divisor of B such that one (Bb, T, C) block is <= target_bytes
    and the grid keeps >= 2 steps (so v7x can shard the batch axis across its
    two TensorCores)."""
    best = 1
    for d in range(1, B + 1):
        if B % d != 0:
            continue
        if d * T * C * itemsize > target_bytes:
            continue
        if B >= 2 and (B // d) < 2:
            continue
        best = d
    return best


# ---------------------------------------------------------------------------
# Wrappers
# ---------------------------------------------------------------------------
def revin_norm(x, weight, bias):
    """RevIN 'norm' mode.

    x: (B, T, C).  Returns (y, stats) where stats is (B, 2, C) float32 with
    stats[:, 0:1, :] = mean and stats[:, 1:2, :] = stdev.
    """
    B, T, C = x.shape
    w2d = weight.reshape(1, C)
    b2d = bias.reshape(1, C)

    bb = _pick_block_b(B, T, C, jnp.dtype(x.dtype).itemsize)
    grid = (B // bb,)

    out_shapes = (
        jax.ShapeDtypeStruct((B, T, C), x.dtype),
        jax.ShapeDtypeStruct((B, 2, C), jnp.float32),
    )
    y, stats = pl.pallas_call(
        _revin_norm_kernel,
        out_shape=out_shapes,
        grid_spec=pltpu.PrefetchScalarGridSpec(
            num_scalar_prefetch=0,
            grid=grid,
            in_specs=[
                pl.BlockSpec((bb, T, C), lambda i: (i, 0, 0)),   # x
                pl.BlockSpec((1, C), lambda i: (0, 0)),          # weight
                pl.BlockSpec((1, C), lambda i: (0, 0)),          # bias
            ],
            out_specs=[
                pl.BlockSpec((bb, T, C), lambda i: (i, 0, 0)),   # y
                pl.BlockSpec((bb, 2, C), lambda i: (i, 0, 0)),   # packed mean/std
            ],
        ),
        compiler_params=pltpu.CompilerParams(
            dimension_semantics=("parallel",),
            vmem_limit_bytes=_VMEM_LIMIT_BYTES),
    )(x, w2d, b2d)
    return y, stats


def revin_denorm(x, stats, weight, bias):
    """RevIN 'denorm' mode. x: (B, T, C), stats: (B, 2, C) from revin_norm."""
    B, T, C = x.shape
    w2d = weight.reshape(1, C)
    b2d = bias.reshape(1, C)

    bb = _pick_block_b(B, T, C, jnp.dtype(x.dtype).itemsize)
    grid = (B // bb,)

    y = pl.pallas_call(
        _revin_denorm_kernel,
        out_shape=jax.ShapeDtypeStruct((B, T, C), x.dtype),
        grid_spec=pltpu.PrefetchScalarGridSpec(
            num_scalar_prefetch=0,
            grid=grid,
            in_specs=[
                pl.BlockSpec((bb, T, C), lambda i: (i, 0, 0)),   # x
                pl.BlockSpec((bb, 2, C), lambda i: (i, 0, 0)),   # packed mean/std
                pl.BlockSpec((1, C), lambda i: (0, 0)),          # weight
                pl.BlockSpec((1, C), lambda i: (0, 0)),          # bias
            ],
            out_specs=pl.BlockSpec((bb, T, C), lambda i: (i, 0, 0)),
        ),
        compiler_params=pltpu.CompilerParams(
            dimension_semantics=("parallel",),
            vmem_limit_bytes=_VMEM_LIMIT_BYTES),
    )(x, stats, w2d, b2d)
    return y


# ---------------------------------------------------------------------------
# Reference (plain JAX) for sanity checking
# ---------------------------------------------------------------------------
def _revin_norm_ref(x, weight, bias):
    xf = x.astype(jnp.float32)
    mean = jnp.mean(xf, axis=1, keepdims=True)
    std = jnp.sqrt(jnp.var(xf, axis=1, keepdims=True) + EPS)
    y = (xf - mean) / std
    y = y * weight + bias
    return y.astype(x.dtype), mean, std


def _revin_denorm_ref(x, mean, std, weight, bias):
    xf = x.astype(jnp.float32)
    xf = xf - bias
    xf = xf / (weight + EPS * EPS)
    xf = xf * std + mean
    return xf.astype(x.dtype)


if __name__ == "__main__":
    key = jax.random.PRNGKey(0)
    B, T, C = 2, 16, 8   # batch, sequence length, num_features

    x = jax.random.normal(key, (B, T, C), dtype=jnp.float32) * 3.0 + 1.5

    # Deterministic parameter init (matches nn.Parameter(torch.ones/zeros)).
    affine_weight = jnp.ones((C,), dtype=jnp.float32)
    affine_bias = jnp.zeros((C,), dtype=jnp.float32)

    # mode == 'norm'
    y, stats = revin_norm(x, affine_weight, affine_bias)
    y = jax.block_until_ready(y)

    # mode == 'denorm' (round-trip back to original)
    x_rec = revin_denorm(y, stats, affine_weight, affine_bias)
    x_rec = jax.block_until_ready(x_rec)

    mean = stats[:, 0:1, :]
    std = stats[:, 1:2, :]

    # sanity check against pure-JAX reference
    y_ref, mean_ref, std_ref = _revin_norm_ref(x, affine_weight, affine_bias)
    x_rec_ref = _revin_denorm_ref(y_ref, mean_ref, std_ref, affine_weight, affine_bias)
    assert jnp.allclose(y, y_ref, atol=1e-5, rtol=1e-5)
    assert jnp.allclose(mean, mean_ref, atol=1e-5, rtol=1e-5)
    assert jnp.allclose(std, std_ref, atol=1e-5, rtol=1e-5)
    assert jnp.allclose(x_rec, x_rec_ref, atol=1e-5, rtol=1e-5)
    assert jnp.allclose(x_rec, x, atol=1e-4, rtol=1e-4)

    print("KERNEL_OK")
</pallas_src>

<mosaic_0001>
module attributes {stable_mosaic.version = 11 : i64} {
  func.func @_revin_norm_kernel(%arg0: i32, %arg1: memref<1x16x8xf32, #tpu.memory_space<vmem>>, %arg2: memref<1x8xf32, #tpu.memory_space<vmem>>, %arg3: memref<1x8xf32, #tpu.memory_space<vmem>>, %arg4: memref<1x16x8xf32, #tpu.memory_space<vmem>>, %arg5: memref<1x2x8xf32, #tpu.memory_space<vmem>>) attributes {dimension_semantics = [#tpu.dimension_semantics<parallel>], iteration_bounds = array<i64: 2>, scalar_prefetch = 0 : i64, scratch_operands = 0 : i64, tpu.core_type = #tpu.core_type<tc>, window_params = [{transform_indices = @transform_0, window_bounds = array<i64: 1, 16, 8>}, {pipeline_mode = #tpu.pipeline_mode<synchronous>, transform_indices = @transform_1, window_bounds = array<i64: 1, 8>}, {pipeline_mode = #tpu.pipeline_mode<synchronous>, transform_indices = @transform_2, window_bounds = array<i64: 1, 8>}, {transform_indices = @transform_3, window_bounds = array<i64: 1, 16, 8>}, {transform_indices = @transform_4, window_bounds = array<i64: 1, 2, 8>}]} {
    %c0 = arith.constant 0 : index
    %c0_0 = arith.constant 0 : index
    %c0_1 = arith.constant 0 : index
    %0 = vector.load %arg1[%c0, %c0_0, %c0_1] : memref<1x16x8xf32, #tpu.memory_space<vmem>>, vector<1x16x8xf32>
    %cst = arith.constant dense<0.000000e+00> : vector<1x8xf32>
    %1 = vector.multi_reduction <add>, %0, %cst [1] : vector<1x16x8xf32> to vector<1x8xf32>
    %2 = vector.shape_cast %1 : vector<1x8xf32> to vector<1x1x8xf32>
    %cst_2 = arith.constant 1.600000e+01 : f32
    %3 = vector.broadcast %cst_2 : f32 to vector<1x1x8xf32>
    %4 = arith.divf %2, %3 : vector<1x1x8xf32>
    %5 = vector.broadcast %4 : vector<1x1x8xf32> to vector<1x16x8xf32>
    %6 = arith.subf %0, %5 : vector<1x16x8xf32>
    %7 = arith.mulf %6, %6 : vector<1x16x8xf32>
    %cst_3 = arith.constant dense<0.000000e+00> : vector<1x8xf32>
    %8 = vector.multi_reduction <add>, %7, %cst_3 [1] : vector<1x16x8xf32> to vector<1x8xf32>
    %9 = vector.shape_cast %8 : vector<1x8xf32> to vector<1x1x8xf32>
    %cst_4 = arith.constant 1.600000e+01 : f32
    %10 = vector.broadcast %cst_4 : f32 to vector<1x1x8xf32>
    %11 = arith.divf %9, %10 : vector<1x1x8xf32>
    %cst_5 = arith.constant 9.99999974E-6 : f32
    %12 = vector.broadcast %cst_5 : f32 to vector<1x1x8xf32>
    %13 = arith.addf %11, %12 : vector<1x1x8xf32>
    %14 = math.sqrt %13 : vector<1x1x8xf32>
    %15 = tpu.reciprocal %14 : vector<1x1x8xf32> -> vector<1x1x8xf32>
    %c0_6 = arith.constant 0 : index
    %c0_7 = arith.constant 0 : index
    %16 = vector.load %arg2[%c0_6, %c0_7] : memref<1x8xf32, #tpu.memory_space<vmem>>, vector<1x8xf32>
    %17 = vector.shape_cast %16 : vector<1x8xf32> to vector<1x1x8xf32>
    %c0_8 = arith.constant 0 : index
    %c0_9 = arith.constant 0 : index
    %18 = vector.load %arg3[%c0_8, %c0_9] : memref<1x8xf32, #tpu.memory_space<vmem>>, vector<1x8xf32>
    %19 = vector.shape_cast %18 : vector<1x8xf32> to vector<1x1x8xf32>
    %20 = arith.mulf %15, %17 : vector<1x1x8xf32>
    %21 = vector.broadcast %20 : vector<1x1x8xf32> to vector<1x16x8xf32>
    %22 = arith.mulf %6, %21 : vector<1x16x8xf32>
    %23 = vector.broadcast %19 : vector<1x1x8xf32> to vector<1x16x8xf32>
    %24 = arith.addf %22, %23 : vector<1x16x8xf32>
    %c0_10 = arith.constant 0 : index
    %c0_11 = arith.constant 0 : index
    %c0_12 = arith.constant 0 : index
    %25 = vector.load %arg4[%c0_10, %c0_11, %c0_12] : memref<1x16x8xf32, #tpu.memory_space<vmem>>, vector<1x16x8xf32>
    tpu.vector_store %arg4[%c0_10, %c0_11, %c0_12], %24 {strides = array<i32>} : memref<1x16x8xf32, #tpu.memory_space<vmem>>, vector<1x16x8xf32>,
    %c0_13 = arith.constant 0 : index
    %c0_14 = arith.constant 0 : index
    %c0_15 = arith.constant 0 : index
    %26 = vector.load %arg5[%c0_13, %c0_14, %c0_15] : memref<1x2x8xf32, #tpu.memory_space<vmem>>, vector<1x1x8xf32>
    tpu.vector_store %arg5[%c0_13, %c0_14, %c0_15], %4 {strides = array<i32>} : memref<1x2x8xf32, #tpu.memory_space<vmem>>, vector<1x1x8xf32>,
    %c0_16 = arith.constant 0 : index
    %c1 = arith.constant 1 : index
    %c0_17 = arith.constant 0 : index
    %27 = vector.load %arg5[%c0_16, %c1, %c0_17] : memref<1x2x8xf32, #tpu.memory_space<vmem>>, vector<1x1x8xf32>
    tpu.vector_store %arg5[%c0_16, %c1, %c0_17], %14 {strides = array<i32>} : memref<1x2x8xf32, #tpu.memory_space<vmem>>, vector<1x1x8xf32>,
    return
  }
  func.func @transform_0(%arg0: i32) -> (i32, i32, i32) {
    %c0_i32 = arith.constant 0 : i32
    %c0_i32_0 = arith.constant 0 : i32
    %c0_i32_1 = arith.constant 0 : i32
    return %arg0, %c0_i32, %c0_i32_0 : i32, i32, i32
  }
  func.func @transform_1(%arg0: i32) -> (i32, i32) {
    %c0_i32 = arith.constant 0 : i32
    %c0_i32_0 = arith.constant 0 : i32
    %c0_i32_1 = arith.constant 0 : i32
    return %c0_i32, %c0_i32_0 : i32, i32
  }
  func.func @transform_2(%arg0: i32) -> (i32, i32) {
    %c0_i32 = arith.constant 0 : i32
    %c0_i32_0 = arith.constant 0 : i32
    %c0_i32_1 = arith.constant 0 : i32
    return %c0_i32, %c0_i32_0 : i32, i32
  }
  func.func @transform_3(%arg0: i32) -> (i32, i32, i32) {
    %c0_i32 = arith.constant 0 : i32
    %c0_i32_0 = arith.constant 0 : i32
    %c0_i32_1 = arith.constant 0 : i32
    return %arg0, %c0_i32, %c0_i32_0 : i32, i32, i32
  }
  func.func @transform_4(%arg0: i32) -> (i32, i32, i32) {
    %c0_i32 = arith.constant 0 : i32
    %c0_i32_0 = arith.constant 0 : i32
    %c0_i32_1 = arith.constant 0 : i32
    return %arg0, %c0_i32, %c0_i32_0 : i32, i32, i32
  }
}

</mosaic_0001>

<llo_original>
// kernel: tpu_custom_call.1
$region0: #{tpu_custom_call.1}
  #allocation0 [shape = 'u32[]', space=smem, size = 0x4, offset = 0x4, fixed_abs, tag = 'smem constant byte address 0x4 - core index']
  #allocation1 [shape = 'u32[144,128]{1,0:T(1,128)}', space=vmem, size = 0x12000, scoped, tag = 'internal scratch']
  %s0 = inlined_call_operand.vmem [shape: f32[2,16,8], index: 0, kind: input, shape index: {}]
  %s1 = inlined_call_operand.vmem [shape: f32[1,8], index: 1, kind: input, shape index: {}]
  %s2 = inlined_call_operand.vmem [shape: f32[1,8], index: 2, kind: input, shape index: {}]
  %s3 = inlined_call_operand.vmem [shape: f32[2,16,8], index: 3, kind: output, shape index: {0}]
  %s4 = inlined_call_operand.hbm [shape: f32[2,2,8], index: 4, kind: output, shape index: {1}]
  %5 = xla_tuple %s3, %s4
  %s6 = sld [smem:[#allocation0]]
  $region53: #{tpu_custom_call.1} parent=0
    _
  %s8 = ssub.s32 1, %s6
  %s9 = scalar_select 0, %s8, %s6
  $region1: #{tpu_custom_call.1} parent=0
    #allocation2 [shape = 'u8[2048]{0}', space=vmem, size = 0x800, scoped, tag = 'output window, operand 1']
    #allocation3 [shape = 's32[2]{0}', space=sflag, size = 0x8, scoped, tag = 'scoped memory for tpu_custom_call.1']
    %10 = vsyncpa [#allocation3], 0
    %s11 = scalar_lea.sflag [#allocation3], 1
    %12 = vsyncpa %s11, 0
    loop: start=0, step=1, limit=4
    $region2: #{tpu_custom_call.1} parent=1 // loop_pre_header
      _
    $region3: #{tpu_custom_call.1} parent=1 // loop_header
      %s14 = sphi 0, %s18
      %p15 = scmp.ge.s32.totalorder %s14, 4
      %s24 = sphi 0, %s26
      %s27 = sphi 0, %s24
      %s28 = sphi 0, %s27
      %s44 = sphi 0, %s28
      %s48 = sphi 0, %s48
      %s50 = sphi 0, %s48
      %s51 = sphi 0, %s50
      %s65 = sphi 0, %s51
      %s69 = sphi 0, %s69
      %s71 = sphi 0, %s69
      %s72 = sphi 0, %s71
      %s86 = sphi 0, %s72
      %s92 = sphi 0, %s94
      %s95 = sphi 0, %s92
      %s96 = sphi 0, %s95
      %s112 = sphi 0, %s96
      %s118 = sphi 0, %s120
      %s121 = sphi 0, %s118
      %s122 = sphi 0, %s121
      %s138 = sphi 0, %s122
    $region4: #{tpu_custom_call.1} parent=1 // loop_header_branch
      %17 = sbr.rel (%p15) target = $region8
    $region5: #{tpu_custom_call.1} parent=1 // loop_body
      %s19 = ssub.s32 %s14, 1
      %s20 = ssub.s32 %s14, 2
      %s21 = sadd.s32 %s14, 1
      %s22 = ssub.s32 %s14, %s21
      %p23 = scmp.eq.s32.totalorder %s22, 0
      %s25 = sadd.s32 %s24, 1
      %s26 = scalar_select %p23, %s24, %s25
      %p29 = pneg %p23
      %p30 = scmp.eq.s32.totalorder %s14, 1
      %p31 = por %p29, %p30
      %p32 = scmp.ne.s32.totalorder %s24, %s27
      %p33 = scmp.eq.s32.totalorder %s14, 0
      %p34 = por %p32, %p33
      %p35 = scmp.ne.s32.totalorder %s24, %s27
      %p36 = scmp.eq.s32.totalorder %s19, 1
      %p37 = por %p35, %p36
      %p38 = scmp.ne.s32.totalorder %s27, %s28
      %p39 = scmp.eq.s32.totalorder %s19, 0
      %p40 = por %p38, %p39
      %p41 = scmp.ne.s32.totalorder %s27, %s28
      %p42 = scmp.eq.s32.totalorder %s20, 1
      %p43 = por %p41, %p42
      %p45 = scmp.ne.s32.totalorder %s28, %s44
      %p46 = scmp.eq.s32.totalorder %s20, 0
      %p47 = por %p45, %p46
      %s49 = sadd.s32 %s48, 1
      %p52 = scmp.eq.s32.totalorder %s14, 1
      %p53 = scmp.ne.s32.totalorder %s48, %s50
      %p54 = scmp.eq.s32.totalorder %s14, 0
      %p55 = por %p53, %p54
      %p56 = scmp.ne.s32.totalorder %s48, %s50
      %p57 = scmp.eq.s32.totalorder %s19, 1
      %p58 = por %p56, %p57
      %p59 = scmp.ne.s32.totalorder %s50, %s51
      %p60 = scmp.eq.s32.totalorder %s19, 0
      %p61 = por %p59, %p60
      %p62 = scmp.ne.s32.totalorder %s50, %s51
      %p63 = scmp.eq.s32.totalorder %s20, 1
      %p64 = por %p62, %p63
      %p66 = scmp.ne.s32.totalorder %s51, %s65
      %p67 = scmp.eq.s32.totalorder %s20, 0
      %p68 = por %p66, %p67
      %s70 = sadd.s32 %s69, 1
      %p73 = scmp.eq.s32.totalorder %s14, 1
      %p74 = scmp.ne.s32.totalorder %s69, %s71
      %p75 = scmp.eq.s32.totalorder %s14, 0
      %p76 = por %p74, %p75
      %p77 = scmp.ne.s32.totalorder %s69, %s71
      %p78 = scmp.eq.s32.totalorder %s19, 1
      %p79 = por %p77, %p78
      %p80 = scmp.ne.s32.totalorder %s71, %s72
      %p81 = scmp.eq.s32.totalorder %s19, 0
      %p82 = por %p80, %p81
      %p83 = scmp.ne.s32.totalorder %s71, %s72
      %p84 = scmp.eq.s32.totalorder %s20, 1
      %p85 = por %p83, %p84
      %p87 = scmp.ne.s32.totalorder %s72, %s86
      %p88 = scmp.eq.s32.totalorder %s20, 0
      %p89 = por %p87, %p88
      %s90 = ssub.s32 %s14, %s21
      %p91 = scmp.eq.s32.totalorder %s90, 0
      %s93 = sadd.s32 %s92, 1
      %s94 = scalar_select %p91, %s92, %s93
      %p97 = pneg %p91
      %p98 = scmp.eq.s32.totalorder %s14, 1
      %p99 = por %p97, %p98
      %p100 = scmp.ne.s32.totalorder %s92, %s95
      %p101 = scmp.eq.s32.totalorder %s14, 0
      %p102 = por %p100, %p101
      %p103 = scmp.ne.s32.totalorder %s92, %s95
      %p104 = scmp.eq.s32.totalorder %s19, 1
      %p105 = por %p103, %p104
      %p106 = scmp.ne.s32.totalorder %s95, %s96
      %p107 = scmp.eq.s32.totalorder %s19, 0
      %p108 = por %p106, %p107
      %p109 = scmp.ne.s32.totalorder %s95, %s96
      %p110 = scmp.eq.s32.totalorder %s20, 1
      %p111 = por %p109, %p110
      %p113 = scmp.ne.s32.totalorder %s96, %s112
      %p114 = scmp.eq.s32.totalorder %s20, 0
      %p115 = por %p113, %p114
      %s116 = ssub.s32 %s14, %s21
      %p117 = scmp.eq.s32.totalorder %s116, 0
      %s119 = sadd.s32 %s118, 1
      %s120 = scalar_select %p117, %s118, %s119
      %p123 = pneg %p117
      %p124 = scmp.eq.s32.totalorder %s14, 1
      %p125 = por %p123, %p124
      %p126 = scmp.ne.s32.totalorder %s118, %s121
      %p127 = scmp.eq.s32.totalorder %s14, 0
      %p128 = por %p126, %p127
      %p129 = scmp.ne.s32.totalorder %s118, %s121
      %p130 = scmp.eq.s32.totalorder %s19, 1
      %p131 = por %p129, %p130
      %p132 = scmp.ne.s32.totalorder %s121, %s122
      %p133 = scmp.eq.s32.totalorder %s19, 0
      %p134 = por %p132, %p133
      %p135 = scmp.ne.s32.totalorder %s121, %s122
      %p136 = scmp.eq.s32.totalorder %s20, 1
      %p137 = por %p135, %p136
      %p139 = scmp.ne.s32.totalorder %s122, %s138
      %p140 = scmp.eq.s32.totalorder %s20, 0
      %p141 = por %p139, %p140
      %p142 = scmp.le.s32.totalorder 1, %s14
      %p143 = scmp.lt.s32.totalorder %s14, 3
      %p144 = pnand %p142, %p143
      %p145 = pneg %p144
      // Predicated region
      $region9: #{tpu_custom_call.1} parent=5 // pred_check
        _
      $region10: #{tpu_custom_call.1} parent=5 // pred_check_branch
        %147 = sbr.rel (%p144) target = $region12
      $region11: #{tpu_custom_call.1} parent=5 // pred_region
        %s148 = ssub.s32 %s14, 1
        // Predicated region
        $region13: #{tpu_custom_call.1} parent=11 // pred_check
          %p149 = pneg %p61
        $region14: #{tpu_custom_call.1} parent=11 // pred_check_branch
          %151 = sbr.rel (%p149) target = $region16
        $region15: #{tpu_custom_call.1} parent=11 // pred_region
          _
        $region16: #{tpu_custom_call.1} parent=11 // pred_fallthru
          _
        // Predicated region
        $region17: #{tpu_custom_call.1} parent=11 // pred_check
          %p152 = pneg %p82
        $region18: #{tpu_custom_call.1} parent=11 // pred_check_branch
          %154 = sbr.rel (%p152) target = $region20
        $region19: #{tpu_custom_call.1} parent=11 // pred_region
          _
        $region20: #{tpu_custom_call.1} parent=11 // pred_fallthru
          _
      $region12: #{tpu_custom_call.1} parent=5 // pred_fallthru
        _
      %p155 = scmp.lt.s32.totalorder %s14, 2
      // Predicated region
      $region21: #{tpu_custom_call.1} parent=5 // pred_check
        %p156 = pneg %p155
      $region22: #{tpu_custom_call.1} parent=5 // pred_check_branch
        %158 = sbr.rel (%p156) target = $region24
      $region23: #{tpu_custom_call.1} parent=5 // pred_region
        // Predicated region
        $region25: #{tpu_custom_call.1} parent=23 // pred_check
          %p159 = pneg %p34
        $region26: #{tpu_custom_call.1} parent=23 // pred_check_branch
          %161 = sbr.rel (%p159) target = $region28
        $region27: #{tpu_custom_call.1} parent=23 // pred_region
          %p162 = scmp.lt.s32.totalorder %s14, 1
          %s163 = scalar_select %p162, %s14, 1
          %s164 = smul.addr %s163, 2
          %s165 = smul.addr %s164, 8
          %s166 = scalar_lea.vmem %s0, %s165
        $region28: #{tpu_custom_call.1} parent=23 // pred_fallthru
          _
      $region24: #{tpu_custom_call.1} parent=5 // pred_fallthru
        _
      %p167 = scmp.le.s32.totalorder 1, %s14
      %p168 = scmp.lt.s32.totalorder %s14, 3
      %p169 = pnand %p167, %p168
      %p170 = pneg %p169
      // Predicated region
      $region29: #{tpu_custom_call.1} parent=5 // pred_check
        _
      $region30: #{tpu_custom_call.1} parent=5 // pred_check_branch
        %172 = sbr.rel (%p169) target = $region32
      $region31: #{tpu_custom_call.1} parent=5 // pred_region
        %s173 = ssub.s32 %s14, 1
        %p174 = scmp.lt.s32.totalorder %s19, 1
        %s175 = scalar_select %p174, %s19, 1
        %s176 = smul.addr %s175, 2
        %s177 = smul.addr %s176, 8
        %s178 = scalar_lea.vmem %s0, %s177
        %p179 = pneg %p40
        %p180 = pneg %p37
        %p181 = pneg %p61
        %p182 = pneg %p58
        %p183 = pneg %p82
        %p184 = pneg %p79
        %p185 = pneg %p108
        %p186 = pneg %p105
        %p187 = scmp.lt.s32.totalorder %s19, 1
        %s188 = scalar_select %p187, %s19, 1
        %s189 = smul.addr %s188, 2
        %s190 = smul.addr %s189, 8
        %s191 = scalar_lea.vmem %s3, %s190
        %p192 = pneg %p134
        %p193 = pneg %p131
        %s194 = sand.u32 %s121, 1
        %s195 = scalar_lea.sflag [#allocation3], %s194
        %s196 = sand.u32 %s121, 1
        %s197 = smul.addr %s196, 2
        %s198 = scalar_lea.vmem [#allocation2], %s197
        %p199 = scmp.lt.s32.totalorder %s19, 1
        %s200 = scalar_select %p199, %s19, 1
        %s201 = smul.addr %s200, 2
        %s202 = smul.addr %s201, 8
        %s203 = scalar_lea.vmem %s0, %s202
        %p204 = scmp.lt.s32.totalorder %s19, 1
        %s205 = scalar_select %p204, %s19, 1
        %s206 = smul.addr %s205, 2
        %s207 = smul.addr %s206, 8
        %s208 = scalar_lea.vmem %s3, %s207
        %v209 = vld [vmem:[%s203] sm:$0xff]
        %v210 = vld [vmem:[%s203 + $0x8] sm:$0xff]
        %vm211 = vcmask 64512
        %v212 = vsel %vm211, %v209, 0.0
        %v213 = vsel %vm211, %v210, 0.0
        %v214 = vadd.f32 %v212, %v213
        %v215 = vrot.slane %v214, 4
        %v216 = vadd.f32 %v214, %v215
        %v217 = vrot.slane %v216, 2
        %v218 = vadd.f32 %v216, %v217
        %v219 = vrot.slane %v218, 1
        %v220 = vadd.f32 %v218, %v219
        %v221 = vrcp.pop 16.0
        %v222 = vmul.f32 %v220, %v221
        %v223 = vsub.f32 %v209, %v222
        %v224 = vsub.f32 %v210, %v222
        %v225 = vmul.f32 %v223, %v223
        %v226 = vmul.f32 %v224, %v224
        %v227 = vsel %vm211, %v225, 0.0
        %v228 = vsel %vm211, %v226, 0.0
        %v229 = vadd.f32 %v227, %v228
        %v230 = vrot.slane %v229, 4
        %v231 = vadd.f32 %v229, %v230
        %v232 = vrot.slane %v231, 2
        %v233 = vadd.f32 %v231, %v232
        %v234 = vrot.slane %v233, 1
        %v235 = vadd.f32 %v233, %v234
        %v236 = vmul.f32 %v235, %v221
        %v237 = vadd.f32 %v236, 1e-05
        %v238 = vrsqrt.pop %v237
        %v239 = vmul.f32 %v237, %v238
        %vm240 = vcmp.eq.f32.partialorder %v237, inf
        %v241 = vsel %vm240, %v237, %v239
        %vm242 = vcmp.eq.f32.partialorder %v237, 0.0
        %v243 = vand.u32 %v237, 2147483648
        %v244 = vsel %vm242, %v243, %v241
        %v245 = vrcp.pop %v244
        %v246 = vld [vmem:[%s1] sm:$0x1]
        %v247 = vld [vmem:[%s2] sm:$0x1]
        %v248 = vmul.f32 %v245, %v246
        %v249 = vlaneseq
        %v250 = vshrl.u32 %v249, 7
        %v251 = vsub.s32 0, %v250
        %v252 = vrot.slane %v248, %v251
        %v253 = vmul.f32 %v223, %v252
        %v254 = vmul.f32 %v224, %v252
        %v256 = vlaneseq
        %v257 = vshrl.u32 %v256, 7
        %v258 = vsub.s32 0, %v257
        %v259 = vrot.slane %v247, %v258
        %v261 = vadd.f32 %v253, %v259
        %v262 = vadd.f32 %v254, %v259
        %263 = vst.msk [vmem:[%s208] sm:$0xff] %vm211, %v261
        %264 = vst.msk [vmem:[%s208 + $0x8] sm:$0xff] %vm211, %v262
        %vm265 = vcmask 57344
        %266 = vst.msk [vmem:[%s198] sm:$0x1] %vm265, %v222
        %267 = vst.msk [vmem:[%s198 + $0x1] sm:$0x1] %vm265, %v244
        %p268 = scmp.lt.s32.totalorder %s19, 1
        %s269 = scalar_select %p268, %s19, 1
        %s270 = smul.addr %s269, 2
        %s271 = smul.addr %s270, 8
        %s272 = scalar_lea.vmem %s3, %s271
        %s273 = sand.u32 %s121, 1
        %s274 = scalar_lea.sflag [#allocation3], %s273
        %s275 = sand.u32 %s121, 1
        %s276 = smul.addr %s275, 2
        %s277 = scalar_lea.vmem [#allocation2], %s276
        // Predicated region
        $region33: #{tpu_custom_call.1} parent=31 // pred_check
          %p278 = pneg %p105
        $region34: #{tpu_custom_call.1} parent=31 // pred_check_branch
          %280 = sbr.rel (%p278) target = $region36
        $region35: #{tpu_custom_call.1} parent=31 // pred_region
          _
        $region36: #{tpu_custom_call.1} parent=31 // pred_fallthru
          _
        // Predicated region
        $region37: #{tpu_custom_call.1} parent=31 // pred_check
          %p281 = pneg %p131
        $region38: #{tpu_custom_call.1} parent=31 // pred_check_branch
          %283 = sbr.rel (%p281) target = $region40
        $region39: #{tpu_custom_call.1} parent=31 // pred_region
          %s285 = ssub.s32 32, 32
          %286 = vsyncadd %s274, %s285
          %s287 = smul.addr %s19, 32
          %s288 = scalar_lea.hbm %s4, %s287
          %s290 = sshll.u32 %s277, 4
          %s291 = int_to_ptr.vmem [resolvable:$true] %s290
          %293 = dma.vmem_to_hbm [thread:$0]  %s291, 32, %s288, %s274
        $region40: #{tpu_custom_call.1} parent=31 // pred_fallthru
          _
      $region32: #{tpu_custom_call.1} parent=5 // pred_fallthru
        _
      %p294 = scmp.le.s32.totalorder 2, %s14
      // Predicated region
      $region41: #{tpu_custom_call.1} parent=5 // pred_check
        %p295 = pneg %p294
      $region42: #{tpu_custom_call.1} parent=5 // pred_check_branch
        %297 = sbr.rel (%p295) target = $region44
      $region43: #{tpu_custom_call.1} parent=5 // pred_region
        %s298 = ssub.s32 %s14, 2
        // Predicated region
        $region45: #{tpu_custom_call.1} parent=43 // pred_check
          %p299 = pneg %p111
        $region46: #{tpu_custom_call.1} parent=43 // pred_check_branch
          %301 = sbr.rel (%p299) target = $region48
        $region47: #{tpu_custom_call.1} parent=43 // pred_region
          %p302 = scmp.lt.s32.totalorder %s20, 1
          %s303 = scalar_select %p302, %s20, 1
          %s304 = smul.addr %s303, 2
          %s305 = smul.addr %s304, 8
          %s306 = scalar_lea.vmem %s3, %s305
        $region48: #{tpu_custom_call.1} parent=43 // pred_fallthru
          _
        // Predicated region
        $region49: #{tpu_custom_call.1} parent=43 // pred_check
          %p307 = pneg %p137
        $region50: #{tpu_custom_call.1} parent=43 // pred_check_branch
          %309 = sbr.rel (%p307) target = $region52
        $region51: #{tpu_custom_call.1} parent=43 // pred_region
          %s310 = sand.u32 %s122, 1
          %s311 = scalar_lea.sflag [#allocation3], %s310
          %s312 = sand.u32 %s122, 1
          %s313 = smul.addr %s312, 2
          %s314 = scalar_lea.vmem [#allocation2], %s313
          %315 = dma.done %s311, 32
        $region52: #{tpu_custom_call.1} parent=43 // pred_fallthru
          _
      $region44: #{tpu_custom_call.1} parent=5 // pred_fallthru
        _
    $region6: #{tpu_custom_call.1} parent=1 // loop_footer
      %s18 = sadd.s32 1, %s14
    $region7: #{tpu_custom_call.1} parent=1 // loop_footer_branch
      %13 = sbr.rel target = $region3
    $region8: #{tpu_custom_call.1} parent=1 // loop_exit
      _
    %316 = vsyncpa [#allocation3], 1
    %s317 = scalar_lea.sflag [#allocation3], 1
    %318 = vsyncpa %s317, 1

</llo_original>
